<compile_context>
chip_gen: v5e
topology: v5e:2x2
jax: 0.10.0
libtpu: 0.0.40
codegen_flags: <defaults>
</compile_context>

<pallas_src>
import functools

import jax
import jax.numpy as jnp
from jax import lax
from jax.experimental import pallas as pl
from jax.experimental.pallas import tpu as pltpu

ESP = 1e-06


def _round_up(x, m):
    return (x + m - 1) // m * m


def _vmem_capacity_bytes():
    try:
        cap = int(getattr(pltpu.get_tpu_info(), "vmem_capacity_bytes", 0))
        if cap > 0:
            return cap
    except Exception:
        pass
    return 64 * 1024 * 1024                     # conservative (v7x per-core VMEM)


def _choose_tiles(B, Q, D, itemsize):
    """Anchor/key tile sizes + explicit VMEM limit derived from chip capacity."""
    vmem_cap = _vmem_capacity_bytes()
    # The queue tile is double-buffered and the kernel keeps a handful of
    # (TB, TN) f32 intermediates live at once -> keep actual use well inside
    # VMEM and set the scoped limit with comfortable headroom.
    budget = min(vmem_cap // 2, 48 * 1024 * 1024)
    TB = int(min(256, _round_up(max(B, 8), 8)))
    live_tiles = 8                              # conservative live-intermediate count
    per_tn = 2 * D * itemsize + live_tiles * TB * 4 + 2 * 4
    TN = int(budget // per_tn) // 128 * 128
    TN = max(128, min(TN, 8192, _round_up(Q, 128)))
    vmem_limit = int(min(vmem_cap * 9 // 10, 96 * 1024 * 1024))
    return TB, TN, vmem_limit


def _supcon_kernel(ylab_ref, qklab_ref, qlab_ref, q_ref, qk_ref, queue_ref,
                   m_ref, l_ref, ps_ref, *, inv_t, n_queue, tiles_per_split):
    """Online-softmax SupCon partials for one (split, anchor-tile, queue-tile)."""
    TB = q_ref.shape[0]
    TN = queue_ref.shape[0]
    s_idx = pl.program_id(0)        # key-split (megacore) axis
    b_idx = pl.program_id(1)        # anchor-tile axis
    n_idx = pl.program_id(2)        # queue-tile axis within this split

    qv = q_ref[...]
    qs = qv * jnp.asarray(inv_t, qv.dtype)      # fold 1/T into the small side

    # ---- (re)initialize accumulators on this split's first queue step ------
    @pl.when(n_idx == 0)
    def _():
        m_ref[...] = jnp.full_like(m_ref, -jnp.inf)
        l_ref[...] = jnp.zeros_like(l_ref)
        ps_ref[...] = jnp.zeros_like(ps_ref)

    # ---- resident [q; k] block (global columns [0, 2B)): split 0, once -----
    # This is the only place the self-diagonal can appear, so queue tiles never
    # pay for the diagonal mask.
    @pl.when(jnp.logical_and(n_idx == 0, s_idx == 0))
    def _():
        n_qk = qk_ref.shape[0]
        s_qk = lax.dot_general(qs, qk_ref[...], (((1,), (1,)), ((), ())),
                               preferred_element_type=jnp.float32)   # (TB, 2B)
        grow = b_idx * TB + lax.broadcasted_iota(jnp.int32, (TB, n_qk), 0)
        gcol = lax.broadcasted_iota(jnp.int32, (TB, n_qk), 1)
        not_self = grow != gcol     # reference masks only the q self-column
        # Like the reference's logits_max, the max DOES include the self column.
        m0 = jnp.max(s_qk, axis=1, keepdims=True)
        p0 = jnp.where(not_self, jnp.exp(s_qk - m0), 0.0)
        pos0 = jnp.logical_and(ylab_ref[...] == qklab_ref[...], not_self)
        m_ref[...] = m0
        l_ref[...] = jnp.sum(p0, axis=1, keepdims=True)
        ps_ref[...] = jnp.sum(jnp.where(pos0, s_qk, 0.0), axis=1, keepdims=True)

    # ---- streamed queue tile ------------------------------------------------
    g = s_idx * tiles_per_split + n_idx          # global queue-tile index
    col0 = g * TN
    s_q = lax.dot_general(qs, queue_ref[...], (((1,), (1,)), ((), ())),
                          preferred_element_type=jnp.float32)         # (TB, TN)
    label_eq = ylab_ref[...] == qlab_ref[...]                         # (TB, TN)

    def update(s_masked, pos):
        """Online-softmax update of the running (TB, 1) accumulators."""
        m_prev = m_ref[...]
        m_new = jnp.maximum(m_prev, jnp.max(s_masked, axis=1, keepdims=True))
        # TODO(synk): for L2-normalized features a fixed m = 1/T would delete
        # this reduction + rescale at an ESP-level numerical difference.
        p = jnp.exp(s_masked - m_new)            # masked columns are -inf -> 0
        l_ref[...] = l_ref[...] * jnp.exp(m_prev - m_new) + jnp.sum(
            p, axis=1, keepdims=True)
        ps_ref[...] = ps_ref[...] + jnp.sum(jnp.where(pos, s_q, 0.0),
                                            axis=1, keepdims=True)
        m_ref[...] = m_new

    # Only tiles that can contain the ragged tail (or clamped duplicate tiles
    # of the last split) pay for the validity mask; interior tiles skip it.
    # Note: every split's first tile always has >= 1 valid column (S <= nQ), so
    # m_new is finite before any fully-masked tile can occur.
    needs_mask = col0 + TN > n_queue

    @pl.when(needs_mask)
    def _():
        gcol = col0 + lax.broadcasted_iota(jnp.int32, (TB, TN), 1)
        valid = gcol < n_queue
        update(jnp.where(valid, s_q, -jnp.inf),
               jnp.logical_and(label_eq, valid))

    @pl.when(jnp.logical_not(needs_mask))
    def _():
        update(s_q, label_eq)


def sup_con_loss(q, k, y, queue_feats, queue_labels, T=0.07):
    """JAX/Pallas equivalent of SupConLoss.forward. Returns a scalar float32."""
    B, D = q.shape
    Q = int(queue_feats.shape[0])
    if Q == 0:                                   # keep the grid non-empty
        queue_feats = jnp.zeros((1, D), q.dtype)
        queue_labels = jnp.full((1,), -1, jnp.int32)
        Q = 1

    itemsize = jnp.dtype(q.dtype).itemsize
    TB, TN, vmem_limit = _choose_tiles(B, Q, D, itemsize)
    Bp = _round_up(B, TB)
    nB = Bp // TB
    nQ = pl.cdiv(Q, TN)
    S = 2 if nQ >= 2 else 1                      # key splits (both TCs on v7x)
    tps = pl.cdiv(nQ, S)                         # queue tiles per split
    nQm1 = nQ - 1

    # Tiny per-call tensors; the big queue_feats tensor is passed through
    # untouched (no concat, no pad -> no extra full-queue HBM traffic).
    q_p = q if Bp == B else jnp.pad(q, ((0, Bp - B), (0, 0)))
    qk_feats = jnp.concatenate([q, k], axis=0)                        # (2B, D)
    y32 = y.astype(jnp.int32)
    ql32 = queue_labels.astype(jnp.int32)
    ylab = y32.reshape(B, 1)
    if Bp != B:
        ylab = jnp.pad(ylab, ((0, Bp - B), (0, 0)), constant_values=-2)
    qk_labels = jnp.concatenate([y32, y32]).reshape(1, 2 * B)
    qlab = ql32.reshape(1, Q)

    # Positive counts are feature-independent: 2x matches within the batch
    # (q and k views) minus the masked q-self column, plus queue matches.
    pc = (2.0 * jnp.sum(y32[:, None] == y32[None, :], axis=1) - 1.0
          + jnp.sum(y32[:, None] == ql32[None, :], axis=1)).astype(jnp.float32)

    kernel = functools.partial(_supcon_kernel, inv_t=float(1.0 / T),
                               n_queue=Q, tiles_per_split=tps)

    def queue_map(s, b, n):
        return (jnp.minimum(s * tps + n, nQm1), 0)

    def qlab_map(s, b, n):
        return (0, jnp.minimum(s * tps + n, nQm1))

    part_shape = jax.ShapeDtypeStruct((S, Bp, 1), jnp.float32)
    part_spec = pl.BlockSpec((None, TB, 1), lambda s, b, n: (s, b, 0))

    m_p, l_p, ps_p = pl.pallas_call(
        kernel,
        out_shape=(part_shape, part_shape, part_shape),
        grid_spec=pltpu.PrefetchScalarGridSpec(
            num_scalar_prefetch=0,
            grid=(S, nB, tps),
            in_specs=[
                pl.BlockSpec((TB, 1), lambda s, b, n: (b, 0)),      # anchor labels
                pl.BlockSpec((1, 2 * B), lambda s, b, n: (0, 0)),   # [y; y] labels
                pl.BlockSpec((1, TN), qlab_map),                    # queue labels
                pl.BlockSpec((TB, D), lambda s, b, n: (b, 0)),      # anchors q
                pl.BlockSpec((2 * B, D), lambda s, b, n: (0, 0)),   # resident [q; k]
                pl.BlockSpec((TN, D), queue_map),                   # queue tiles
            ],
            out_specs=[part_spec, part_spec, part_spec],
        ),
        compiler_params=pltpu.CompilerParams(
            dimension_semantics=("parallel", "parallel", "arbitrary"),
            vmem_limit_bytes=vmem_limit),
        cost_estimate=pl.CostEstimate(
            flops=2 * Bp * (S * tps * TN + 2 * B) * D,
            transcendentals=Bp * (S * tps * TN + 2 * B),
            bytes_accessed=(nB * Q + Bp + 2 * B) * D * itemsize
                           + (nB * Q + Bp + 2 * B) * 4 + 3 * S * Bp * 4),
    )(ylab, qk_labels, qlab, q_p, qk_feats, queue_feats)

    # Merge the per-split partials (tiny: S x B scalars) and finish the loss.
    m_p = m_p[:, :B, 0]                                        # (S, B)
    l_p = l_p[:, :B, 0]
    ps_p = ps_p[:, :B, 0]
    m = jnp.max(m_p, axis=0)                                   # (B,)
    l = jnp.sum(l_p * jnp.exp(m_p - m[None, :]), axis=0)       # (B,)
    ps = jnp.sum(ps_p, axis=0)                                 # (B,)
    mean_log_prob_pos = ps / pc - m - jnp.log(l + ESP)
    return -jnp.mean(mean_log_prob_pos)


def _reference(q, k, y, queue_feats, queue_labels, T=0.07):
    """Pure-JAX reference mirroring the PyTorch code (for verification)."""
    B = q.shape[0]
    feats = jnp.concatenate([q, k, queue_feats], axis=0)
    labels = jnp.concatenate([y, y, queue_labels], axis=0).reshape(-1, 1)
    mask = (labels[:B] == labels.T).astype(jnp.float32)
    adc = (q @ feats.T) / T
    logits = adc - jnp.max(adc, axis=1, keepdims=True)
    logits_mask = 1.0 - jnp.eye(B, feats.shape[0], dtype=jnp.float32)
    mask = mask * logits_mask
    exp_logits = jnp.exp(logits) * logits_mask
    log_prob = logits - jnp.log(exp_logits.sum(1, keepdims=True) + ESP)
    mean_log_prob_pos = (mask * log_prob).sum(1) / mask.sum(1)
    return -mean_log_prob_pos.mean()


if __name__ == "__main__":
    key = jax.random.PRNGKey(0)
    kq, kk, ky, kqf, kql = jax.random.split(key, 5)

    B, D, Qn, num_classes = 8, 32, 48, 4
    q = jax.random.normal(kq, (B, D), dtype=jnp.float32)
    k = jax.random.normal(kk, (B, D), dtype=jnp.float32)
    y = jax.random.randint(ky, (B,), 0, num_classes, dtype=jnp.int32)
    queue_feats = jax.random.normal(kqf, (Qn, D), dtype=jnp.float32)
    queue_labels = jax.random.randint(kql, (Qn,), 0, num_classes, dtype=jnp.int32)

    # SupMoCo-style features are L2-normalized.
    q = q / jnp.linalg.norm(q, axis=1, keepdims=True)
    k = k / jnp.linalg.norm(k, axis=1, keepdims=True)
    queue_feats = queue_feats / jnp.linalg.norm(queue_feats, axis=1, keepdims=True)

    ref = _reference(q, k, y, queue_feats, queue_labels, T=0.07)

    # f32 path: strict check against the reference.
    loss = sup_con_loss(q, k, y, queue_feats, queue_labels, T=0.07)
    loss = jax.block_until_ready(loss)
    assert jnp.allclose(loss, ref, rtol=1e-4, atol=1e-4), (loss, ref)

    # bf16 feature path (halves HBM traffic; f32 accumulation): loose check.
    loss_bf16 = sup_con_loss(q.astype(jnp.bfloat16), k.astype(jnp.bfloat16), y,
                             queue_feats.astype(jnp.bfloat16), queue_labels,
                             T=0.07)
    loss_bf16 = jax.block_until_ready(loss_bf16)
    assert jnp.allclose(jnp.float32(loss_bf16), ref, rtol=0.05, atol=0.25), (
        loss_bf16, ref)

    print("KERNEL_OK")
</pallas_src>

<mosaic_0001>
module attributes {stable_mosaic.version = 11 : i64} {
  func.func @_supcon_kernel(%arg0: i32, %arg1: i32, %arg2: i32, %arg3: memref<8x1xi32, #tpu.memory_space<vmem>>, %arg4: memref<1x16xi32, #tpu.memory_space<vmem>>, %arg5: memref<1x128xi32, #tpu.memory_space<vmem>>, %arg6: memref<8x32xf32, #tpu.memory_space<vmem>>, %arg7: memref<16x32xf32, #tpu.memory_space<vmem>>, %arg8: memref<128x32xf32, #tpu.memory_space<vmem>>, %arg9: memref<1x8x1xf32, #tpu.memory_space<vmem>>, %arg10: memref<1x8x1xf32, #tpu.memory_space<vmem>>, %arg11: memref<1x8x1xf32, #tpu.memory_space<vmem>>) attributes {dimension_semantics = [#tpu.dimension_semantics<parallel>, #tpu.dimension_semantics<parallel>, #tpu.dimension_semantics<arbitrary>], iteration_bounds = array<i64: 1, 1, 1>, scalar_prefetch = 0 : i64, scratch_operands = 0 : i64, tpu.core_type = #tpu.core_type<tc>, window_params = [{transform_indices = @transform_0, window_bounds = array<i64: 8, 1>}, {pipeline_mode = #tpu.pipeline_mode<synchronous>, transform_indices = @transform_1, window_bounds = array<i64: 1, 16>}, {transform_indices = @transform_2, window_bounds = array<i64: 1, 128>}, {transform_indices = @transform_3, window_bounds = array<i64: 8, 32>}, {pipeline_mode = #tpu.pipeline_mode<synchronous>, transform_indices = @transform_4, window_bounds = array<i64: 16, 32>}, {transform_indices = @transform_5, window_bounds = array<i64: 128, 32>}, {transform_indices = @transform_6, window_bounds = array<i64: 1, 8, 1>}, {transform_indices = @transform_7, window_bounds = array<i64: 1, 8, 1>}, {transform_indices = @transform_8, window_bounds = array<i64: 1, 8, 1>}]} {
    %c0 = arith.constant 0 : index
    %c0_0 = arith.constant 0 : index
    %0 = vector.load %arg6[%c0, %c0_0] : memref<8x32xf32, #tpu.memory_space<vmem>>, vector<8x32xf32>
    %cst = arith.constant 14.2857141 : f32
    %1 = vector.broadcast %cst : f32 to vector<8x32xf32>
    %2 = arith.mulf %0, %1 : vector<8x32xf32>
    %c0_i32 = arith.constant 0 : i32
    %3 = arith.cmpi eq, %arg2, %c0_i32 : i32
    %4 = arith.extui %3 : i1 to i32
    %c0_i32_1 = arith.constant 0 : i32
    %5 = arith.cmpi ne, %4, %c0_i32_1 : i32
    scf.if %5 {
      %cst_15 = arith.constant 0xFF800000 : f32
      %28 = vector.broadcast %cst_15 : f32 to vector<8x1xf32>
      %c0_16 = arith.constant 0 : index
      %c0_17 = arith.constant 0 : index
      %c0_18 = arith.constant 0 : index
      %29 = vector.load %arg9[%c0_16, %c0_17, %c0_18] : memref<1x8x1xf32, #tpu.memory_space<vmem>>, vector<1x8x1xf32>
      %30 = vector.shape_cast %29 : vector<1x8x1xf32> to vector<8x1xf32>
      %31 = vector.shape_cast %28 : vector<8x1xf32> to vector<1x8x1xf32>
      tpu.vector_store %arg9[%c0_16, %c0_17, %c0_18], %31 {strides = array<i32>} : memref<1x8x1xf32, #tpu.memory_space<vmem>>, vector<1x8x1xf32>,
      %cst_19 = arith.constant 0.000000e+00 : f32
      %32 = vector.broadcast %cst_19 : f32 to vector<8x1xf32>
      %c0_20 = arith.constant 0 : index
      %c0_21 = arith.constant 0 : index
      %c0_22 = arith.constant 0 : index
      %33 = vector.load %arg10[%c0_20, %c0_21, %c0_22] : memref<1x8x1xf32, #tpu.memory_space<vmem>>, vector<1x8x1xf32>
      %34 = vector.shape_cast %33 : vector<1x8x1xf32> to vector<8x1xf32>
      %35 = vector.shape_cast %32 : vector<8x1xf32> to vector<1x8x1xf32>
      tpu.vector_store %arg10[%c0_20, %c0_21, %c0_22], %35 {strides = array<i32>} : memref<1x8x1xf32, #tpu.memory_space<vmem>>, vector<1x8x1xf32>,
      %cst_23 = arith.constant 0.000000e+00 : f32
      %36 = vector.broadcast %cst_23 : f32 to vector<8x1xf32>
      %c0_24 = arith.constant 0 : index
      %c0_25 = arith.constant 0 : index
      %c0_26 = arith.constant 0 : index
      %37 = vector.load %arg11[%c0_24, %c0_25, %c0_26] : memref<1x8x1xf32, #tpu.memory_space<vmem>>, vector<1x8x1xf32>
      %38 = vector.shape_cast %37 : vector<1x8x1xf32> to vector<8x1xf32>
      %39 = vector.shape_cast %36 : vector<8x1xf32> to vector<1x8x1xf32>
      tpu.vector_store %arg11[%c0_24, %c0_25, %c0_26], %39 {strides = array<i32>} : memref<1x8x1xf32, #tpu.memory_space<vmem>>, vector<1x8x1xf32>,
    } else {
    }
    %c0_i32_2 = arith.constant 0 : i32
    %6 = arith.cmpi eq, %arg2, %c0_i32_2 : i32
    %c0_i32_3 = arith.constant 0 : i32
    %7 = arith.cmpi eq, %arg0, %c0_i32_3 : i32
    %8 = arith.andi %6, %7 : i1
    %9 = arith.extui %8 : i1 to i32
    %c0_i32_4 = arith.constant 0 : i32
    %10 = arith.cmpi ne, %9, %c0_i32_4 : i32
    scf.if %10 {
      %c0_15 = arith.constant 0 : index
      %c0_16 = arith.constant 0 : index
      %28 = vector.load %arg7[%c0_15, %c0_16] : memref<16x32xf32, #tpu.memory_space<vmem>>, vector<16x32xf32>
      %cst_17 = arith.constant dense<0.000000e+00> : vector<8x16xf32>
      %29 = tpu.matmul %2, %28, %cst_17 {dimension_numbers = #tpu.dot_dimension_numbers<[1], [1], [0], [0], [0, 0, 1, 0], [], []>} : vector<8x32xf32>, vector<16x32xf32>, vector<8x16xf32> -> vector<8x16xf32>
      %c8_i32 = arith.constant 8 : i32
      %30 = arith.muli %arg1, %c8_i32 : i32
      %31 = tpu.iota {dimensions = array<i32: 0>} : vector<8x16xi32>
      %32 = vector.broadcast %30 : i32 to vector<8x16xi32>
      %33 = arith.addi %32, %31 : vector<8x16xi32>
      %34 = tpu.iota {dimensions = array<i32: 1>} : vector<8x16xi32>
      %35 = arith.cmpi ne, %33, %34 : vector<8x16xi32>
      %cst_18 = arith.constant dense<0xFF800000> : vector<8xf32>
      %36 = vector.multi_reduction <maximumf>, %29, %cst_18 [1] : vector<8x16xf32> to vector<8xf32>
      %37 = vector.shape_cast %36 : vector<8xf32> to vector<8x1xf32>
      %38 = vector.broadcast %37 : vector<8x1xf32> to vector<8x16xf32>
      %39 = arith.subf %29, %38 : vector<8x16xf32>
      %40 = math.exp %39 : vector<8x16xf32>
      %cst_19 = arith.constant 0.000000e+00 : f32
      %41 = vector.broadcast %cst_19 : f32 to vector<8x16xf32>
      %42 = arith.select %35, %40, %41 : vector<8x16xi1>, vector<8x16xf32>
      %c0_20 = arith.constant 0 : index
      %c0_21 = arith.constant 0 : index
      %43 = vector.load %arg3[%c0_20, %c0_21] : memref<8x1xi32, #tpu.memory_space<vmem>>, vector<8x1xi32>
      %c0_22 = arith.constant 0 : index
      %c0_23 = arith.constant 0 : index
      %44 = vector.load %arg4[%c0_22, %c0_23] : memref<1x16xi32, #tpu.memory_space<vmem>>, vector<1x16xi32>
      %45 = vector.broadcast %43 : vector<8x1xi32> to vector<8x16xi32>
      %46 = vector.broadcast %44 : vector<1x16xi32> to vector<8x16xi32>
      %47 = arith.cmpi eq, %45, %46 : vector<8x16xi32>
      %48 = arith.andi %47, %35 : vector<8x16xi1>
      %c0_24 = arith.constant 0 : index
      %c0_25 = arith.constant 0 : index
      %c0_26 = arith.constant 0 : index
      %49 = vector.load %arg9[%c0_24, %c0_25, %c0_26] : memref<1x8x1xf32, #tpu.memory_space<vmem>>, vector<1x8x1xf32>
      %50 = vector.shape_cast %49 : vector<1x8x1xf32> to vector<8x1xf32>
      %51 = vector.shape_cast %37 : vector<8x1xf32> to vector<1x8x1xf32>
      tpu.vector_store %arg9[%c0_24, %c0_25, %c0_26], %51 {strides = array<i32>} : memref<1x8x1xf32, #tpu.memory_space<vmem>>, vector<1x8x1xf32>,
      %cst_27 = arith.constant dense<0.000000e+00> : vector<8xf32>
      %52 = vector.multi_reduction <add>, %42, %cst_27 [1] : vector<8x16xf32> to vector<8xf32>
      %53 = vector.shape_cast %52 : vector<8xf32> to vector<8x1xf32>
      %c0_28 = arith.constant 0 : index
      %c0_29 = arith.constant 0 : index
      %c0_30 = arith.constant 0 : index
      %54 = vector.load %arg10[%c0_28, %c0_29, %c0_30] : memref<1x8x1xf32, #tpu.memory_space<vmem>>, vector<1x8x1xf32>
      %55 = vector.shape_cast %54 : vector<1x8x1xf32> to vector<8x1xf32>
      %56 = vector.shape_cast %53 : vector<8x1xf32> to vector<1x8x1xf32>
      tpu.vector_store %arg10[%c0_28, %c0_29, %c0_30], %56 {strides = array<i32>} : memref<1x8x1xf32, #tpu.memory_space<vmem>>, vector<1x8x1xf32>,
      %cst_31 = arith.constant 0.000000e+00 : f32
      %57 = vector.broadcast %cst_31 : f32 to vector<8x16xf32>
      %58 = arith.select %48, %29, %57 : vector<8x16xi1>, vector<8x16xf32>
      %cst_32 = arith.constant dense<0.000000e+00> : vector<8xf32>
      %59 = vector.multi_reduction <add>, %58, %cst_32 [1] : vector<8x16xf32> to vector<8xf32>
      %60 = vector.shape_cast %59 : vector<8xf32> to vector<8x1xf32>
      %c0_33 = arith.constant 0 : index
      %c0_34 = arith.constant 0 : index
      %c0_35 = arith.constant 0 : index
      %61 = vector.load %arg11[%c0_33, %c0_34, %c0_35] : memref<1x8x1xf32, #tpu.memory_space<vmem>>, vector<1x8x1xf32>
      %62 = vector.shape_cast %61 : vector<1x8x1xf32> to vector<8x1xf32>
      %63 = vector.shape_cast %60 : vector<8x1xf32> to vector<1x8x1xf32>
      tpu.vector_store %arg11[%c0_33, %c0_34, %c0_35], %63 {strides = array<i32>} : memref<1x8x1xf32, #tpu.memory_space<vmem>>, vector<1x8x1xf32>,
    } else {
    }
    %c1_i32 = arith.constant 1 : i32
    %11 = arith.muli %arg0, %c1_i32 : i32
    %12 = arith.addi %11, %arg2 : i32
    %c128_i32 = arith.constant 128 : i32
    %13 = arith.muli %12, %c128_i32 : i32
    %c0_5 = arith.constant 0 : index
    %c0_6 = arith.constant 0 : index
    %14 = vector.load %arg8[%c0_5, %c0_6] : memref<128x32xf32, #tpu.memory_space<vmem>>, vector<128x32xf32>
    %cst_7 = arith.constant dense<0.000000e+00> : vector<8x128xf32>
    %15 = tpu.matmul %2, %14, %cst_7 {dimension_numbers = #tpu.dot_dimension_numbers<[1], [1], [0], [0], [0, 0, 1, 0], [], []>} : vector<8x32xf32>, vector<128x32xf32>, vector<8x128xf32> -> vector<8x128xf32>
    %c0_8 = arith.constant 0 : index
    %c0_9 = arith.constant 0 : index
    %16 = vector.load %arg3[%c0_8, %c0_9] : memref<8x1xi32, #tpu.memory_space<vmem>>, vector<8x1xi32>
    %c0_10 = arith.constant 0 : index
    %c0_11 = arith.constant 0 : index
    %17 = vector.load %arg5[%c0_10, %c0_11] : memref<1x128xi32, #tpu.memory_space<vmem>>, vector<1x128xi32>
    %18 = vector.broadcast %16 : vector<8x1xi32> to vector<8x128xi32>
    %19 = vector.broadcast %17 : vector<1x128xi32> to vector<8x128xi32>
    %20 = arith.cmpi eq, %18, %19 : vector<8x128xi32>
    %c128_i32_12 = arith.constant 128 : i32
    %21 = arith.addi %13, %c128_i32_12 : i32
    %c48_i32 = arith.constant 48 : i32
    %22 = arith.cmpi sgt, %21, %c48_i32 : i32
    %23 = arith.extui %22 : i1 to i32
    %c0_i32_13 = arith.constant 0 : i32
    %24 = arith.cmpi ne, %23, %c0_i32_13 : i32
    scf.if %24 {
      %28 = tpu.iota {dimensions = array<i32: 1>} : vector<8x128xi32>
      %29 = vector.broadcast %13 : i32 to vector<8x128xi32>
      %30 = arith.addi %29, %28 : vector<8x128xi32>
      %c48_i32_15 = arith.constant 48 : i32
      %31 = vector.broadcast %c48_i32_15 : i32 to vector<8x128xi32>
      %32 = arith.cmpi slt, %30, %31 : vector<8x128xi32>
      %cst_16 = arith.constant 0xFF800000 : f32
      %33 = vector.broadcast %cst_16 : f32 to vector<8x128xf32>
      %34 = arith.select %32, %15, %33 : vector<8x128xi1>, vector<8x128xf32>
      %35 = arith.andi %20, %32 : vector<8x128xi1>
      %c0_17 = arith.constant 0 : index
      %c0_18 = arith.constant 0 : index
      %c0_19 = arith.constant 0 : index
      %36 = vector.load %arg9[%c0_17, %c0_18, %c0_19] : memref<1x8x1xf32, #tpu.memory_space<vmem>>, vector<1x8x1xf32>
      %37 = vector.shape_cast %36 : vector<1x8x1xf32> to vector<8x1xf32>
      %cst_20 = arith.constant dense<0xFF800000> : vector<8xf32>
      %38 = vector.multi_reduction <maximumf>, %34, %cst_20 [1] : vector<8x128xf32> to vector<8xf32>
      %39 = vector.shape_cast %38 : vector<8xf32> to vector<8x1xf32>
      %40 = arith.maximumf %37, %39 : vector<8x1xf32>
      %41 = vector.broadcast %40 : vector<8x1xf32> to vector<8x128xf32>
      %42 = arith.subf %34, %41 : vector<8x128xf32>
      %43 = math.exp %42 : vector<8x128xf32>
      %c0_21 = arith.constant 0 : index
      %c0_22 = arith.constant 0 : index
      %c0_23 = arith.constant 0 : index
      %44 = vector.load %arg10[%c0_21, %c0_22, %c0_23] : memref<1x8x1xf32, #tpu.memory_space<vmem>>, vector<1x8x1xf32>
      %45 = vector.shape_cast %44 : vector<1x8x1xf32> to vector<8x1xf32>
      %46 = arith.subf %37, %40 : vector<8x1xf32>
      %47 = math.exp %46 : vector<8x1xf32>
      %48 = arith.mulf %45, %47 : vector<8x1xf32>
      %cst_24 = arith.constant dense<0.000000e+00> : vector<8xf32>
      %49 = vector.multi_reduction <add>, %43, %cst_24 [1] : vector<8x128xf32> to vector<8xf32>
      %50 = vector.shape_cast %49 : vector<8xf32> to vector<8x1xf32>
      %51 = arith.addf %48, %50 : vector<8x1xf32>
      %c0_25 = arith.constant 0 : index
      %c0_26 = arith.constant 0 : index
      %c0_27 = arith.constant 0 : index
      %52 = vector.load %arg10[%c0_25, %c0_26, %c0_27] : memref<1x8x1xf32, #tpu.memory_space<vmem>>, vector<1x8x1xf32>
      %53 = vector.shape_cast %52 : vector<1x8x1xf32> to vector<8x1xf32>
      %54 = vector.shape_cast %51 : vector<8x1xf32> to vector<1x8x1xf32>
      tpu.vector_store %arg10[%c0_25, %c0_26, %c0_27], %54 {strides = array<i32>} : memref<1x8x1xf32, #tpu.memory_space<vmem>>, vector<1x8x1xf32>,
      %c0_28 = arith.constant 0 : index
      %c0_29 = arith.constant 0 : index
      %c0_30 = arith.constant 0 : index
      %55 = vector.load %arg11[%c0_28, %c0_29, %c0_30] : memref<1x8x1xf32, #tpu.memory_space<vmem>>, vector<1x8x1xf32>
      %56 = vector.shape_cast %55 : vector<1x8x1xf32> to vector<8x1xf32>
      %cst_31 = arith.constant 0.000000e+00 : f32
      %57 = vector.broadcast %cst_31 : f32 to vector<8x128xf32>
      %58 = arith.select %35, %15, %57 : vector<8x128xi1>, vector<8x128xf32>
      %cst_32 = arith.constant dense<0.000000e+00> : vector<8xf32>
      %59 = vector.multi_reduction <add>, %58, %cst_32 [1] : vector<8x128xf32> to vector<8xf32>
      %60 = vector.shape_cast %59 : vector<8xf32> to vector<8x1xf32>
      %61 = arith.addf %56, %60 : vector<8x1xf32>
      %c0_33 = arith.constant 0 : index
      %c0_34 = arith.constant 0 : index
      %c0_35 = arith.constant 0 : index
      %62 = vector.load %arg11[%c0_33, %c0_34, %c0_35] : memref<1x8x1xf32, #tpu.memory_space<vmem>>, vector<1x8x1xf32>
      %63 = vector.shape_cast %62 : vector<1x8x1xf32> to vector<8x1xf32>
      %64 = vector.shape_cast %61 : vector<8x1xf32> to vector<1x8x1xf32>
      tpu.vector_store %arg11[%c0_33, %c0_34, %c0_35], %64 {strides = array<i32>} : memref<1x8x1xf32, #tpu.memory_space<vmem>>, vector<1x8x1xf32>,
      %c0_36 = arith.constant 0 : index
      %c0_37 = arith.constant 0 : index
      %c0_38 = arith.constant 0 : index
      %65 = vector.load %arg9[%c0_36, %c0_37, %c0_38] : memref<1x8x1xf32, #tpu.memory_space<vmem>>, vector<1x8x1xf32>
      %66 = vector.shape_cast %65 : vector<1x8x1xf32> to vector<8x1xf32>
      %67 = vector.shape_cast %40 : vector<8x1xf32> to vector<1x8x1xf32>
      tpu.vector_store %arg9[%c0_36, %c0_37, %c0_38], %67 {strides = array<i32>} : memref<1x8x1xf32, #tpu.memory_space<vmem>>, vector<1x8x1xf32>,
    } else {
    }
    %true = arith.constant true
    %25 = arith.xori %22, %true : i1
    %26 = arith.extui %25 : i1 to i32
    %c0_i32_14 = arith.constant 0 : i32
    %27 = arith.cmpi ne, %26, %c0_i32_14 : i32
    scf.if %27 {
      %c0_15 = arith.constant 0 : index
      %c0_16 = arith.constant 0 : index
      %c0_17 = arith.constant 0 : index
      %28 = vector.load %arg9[%c0_15, %c0_16, %c0_17] : memref<1x8x1xf32, #tpu.memory_space<vmem>>, vector<1x8x1xf32>
      %29 = vector.shape_cast %28 : vector<1x8x1xf32> to vector<8x1xf32>
      %cst_18 = arith.constant dense<0xFF800000> : vector<8xf32>
      %30 = vector.multi_reduction <maximumf>, %15, %cst_18 [1] : vector<8x128xf32> to vector<8xf32>
      %31 = vector.shape_cast %30 : vector<8xf32> to vector<8x1xf32>
      %32 = arith.maximumf %29, %31 : vector<8x1xf32>
      %33 = vector.broadcast %32 : vector<8x1xf32> to vector<8x128xf32>
      %34 = arith.subf %15, %33 : vector<8x128xf32>
      %35 = math.exp %34 : vector<8x128xf32>
      %c0_19 = arith.constant 0 : index
      %c0_20 = arith.constant 0 : index
      %c0_21 = arith.constant 0 : index
      %36 = vector.load %arg10[%c0_19, %c0_20, %c0_21] : memref<1x8x1xf32, #tpu.memory_space<vmem>>, vector<1x8x1xf32>
      %37 = vector.shape_cast %36 : vector<1x8x1xf32> to vector<8x1xf32>
      %38 = arith.subf %29, %32 : vector<8x1xf32>
      %39 = math.exp %38 : vector<8x1xf32>
      %40 = arith.mulf %37, %39 : vector<8x1xf32>
      %cst_22 = arith.constant dense<0.000000e+00> : vector<8xf32>
      %41 = vector.multi_reduction <add>, %35, %cst_22 [1] : vector<8x128xf32> to vector<8xf32>
      %42 = vector.shape_cast %41 : vector<8xf32> to vector<8x1xf32>
      %43 = arith.addf %40, %42 : vector<8x1xf32>
      %c0_23 = arith.constant 0 : index
      %c0_24 = arith.constant 0 : index
      %c0_25 = arith.constant 0 : index
      %44 = vector.load %arg10[%c0_23, %c0_24, %c0_25] : memref<1x8x1xf32, #tpu.memory_space<vmem>>, vector<1x8x1xf32>
      %45 = vector.shape_cast %44 : vector<1x8x1xf32> to vector<8x1xf32>
      %46 = vector.shape_cast %43 : vector<8x1xf32> to vector<1x8x1xf32>
      tpu.vector_store %arg10[%c0_23, %c0_24, %c0_25], %46 {strides = array<i32>} : memref<1x8x1xf32, #tpu.memory_space<vmem>>, vector<1x8x1xf32>,
      %c0_26 = arith.constant 0 : index
      %c0_27 = arith.constant 0 : index
      %c0_28 = arith.constant 0 : index
      %47 = vector.load %arg11[%c0_26, %c0_27, %c0_28] : memref<1x8x1xf32, #tpu.memory_space<vmem>>, vector<1x8x1xf32>
      %48 = vector.shape_cast %47 : vector<1x8x1xf32> to vector<8x1xf32>
      %cst_29 = arith.constant 0.000000e+00 : f32
      %49 = vector.broadcast %cst_29 : f32 to vector<8x128xf32>
      %50 = arith.select %20, %15, %49 : vector<8x128xi1>, vector<8x128xf32>
      %cst_30 = arith.constant dense<0.000000e+00> : vector<8xf32>
      %51 = vector.multi_reduction <add>, %50, %cst_30 [1] : vector<8x128xf32> to vector<8xf32>
      %52 = vector.shape_cast %51 : vector<8xf32> to vector<8x1xf32>
      %53 = arith.addf %48, %52 : vector<8x1xf32>
      %c0_31 = arith.constant 0 : index
      %c0_32 = arith.constant 0 : index
      %c0_33 = arith.constant 0 : index
      %54 = vector.load %arg11[%c0_31, %c0_32, %c0_33] : memref<1x8x1xf32, #tpu.memory_space<vmem>>, vector<1x8x1xf32>
      %55 = vector.shape_cast %54 : vector<1x8x1xf32> to vector<8x1xf32>
      %56 = vector.shape_cast %53 : vector<8x1xf32> to vector<1x8x1xf32>
      tpu.vector_store %arg11[%c0_31, %c0_32, %c0_33], %56 {strides = array<i32>} : memref<1x8x1xf32, #tpu.memory_space<vmem>>, vector<1x8x1xf32>,
      %c0_34 = arith.constant 0 : index
      %c0_35 = arith.constant 0 : index
      %c0_36 = arith.constant 0 : index
      %57 = vector.load %arg9[%c0_34, %c0_35, %c0_36] : memref<1x8x1xf32, #tpu.memory_space<vmem>>, vector<1x8x1xf32>
      %58 = vector.shape_cast %57 : vector<1x8x1xf32> to vector<8x1xf32>
      %59 = vector.shape_cast %32 : vector<8x1xf32> to vector<1x8x1xf32>
      tpu.vector_store %arg9[%c0_34, %c0_35, %c0_36], %59 {strides = array<i32>} : memref<1x8x1xf32, #tpu.memory_space<vmem>>, vector<1x8x1xf32>,
    } else {
    }
    return
  }
  func.func @transform_0(%arg0: i32, %arg1: i32, %arg2: i32) -> (i32, i32) {
    %c0_i32 = arith.constant 0 : i32
    %c0_i32_0 = arith.constant 0 : i32
    return %arg1, %c0_i32 : i32, i32
  }
  func.func @transform_1(%arg0: i32, %arg1: i32, %arg2: i32) -> (i32, i32) {
    %c0_i32 = arith.constant 0 : i32
    %c0_i32_0 = arith.constant 0 : i32
    %c0_i32_1 = arith.constant 0 : i32
    return %c0_i32, %c0_i32_0 : i32, i32
  }
  func.func @transform_2(%arg0: i32, %arg1: i32, %arg2: i32) -> (i32, i32) {
    %c1_i32 = arith.constant 1 : i32
    %0 = arith.muli %arg0, %c1_i32 : i32
    %1 = arith.addi %0, %arg2 : i32
    %c0_i32 = arith.constant 0 : i32
    %2 = arith.minsi %1, %c0_i32 : i32
    %c0_i32_0 = arith.constant 0 : i32
    %c0_i32_1 = arith.constant 0 : i32
    return %c0_i32_0, %2 : i32, i32
  }
  func.func @transform_3(%arg0: i32, %arg1: i32, %arg2: i32) -> (i32, i32) {
    %c0_i32 = arith.constant 0 : i32
    %c0_i32_0 = arith.constant 0 : i32
    return %arg1, %c0_i32 : i32, i32
  }
  func.func @transform_4(%arg0: i32, %arg1: i32, %arg2: i32) -> (i32, i32) {
    %c0_i32 = arith.constant 0 : i32
    %c0_i32_0 = arith.constant 0 : i32
    %c0_i32_1 = arith.constant 0 : i32
    return %c0_i32, %c0_i32_0 : i32, i32
  }
  func.func @transform_5(%arg0: i32, %arg1: i32, %arg2: i32) -> (i32, i32) {
    %c1_i32 = arith.constant 1 : i32
    %0 = arith.muli %arg0, %c1_i32 : i32
    %1 = arith.addi %0, %arg2 : i32
    %c0_i32 = arith.constant 0 : i32
    %2 = arith.minsi %1, %c0_i32 : i32
    %c0_i32_0 = arith.constant 0 : i32
    %c0_i32_1 = arith.constant 0 : i32
    return %2, %c0_i32_0 : i32, i32
  }
  func.func @transform_6(%arg0: i32, %arg1: i32, %arg2: i32) -> (i32, i32, i32) {
    %c0_i32 = arith.constant 0 : i32
    %c0_i32_0 = arith.constant 0 : i32
    return %arg0, %arg1, %c0_i32 : i32, i32, i32
  }
  func.func @transform_7(%arg0: i32, %arg1: i32, %arg2: i32) -> (i32, i32, i32) {
    %c0_i32 = arith.constant 0 : i32
    %c0_i32_0 = arith.constant 0 : i32
    return %arg0, %arg1, %c0_i32 : i32, i32, i32
  }
  func.func @transform_8(%arg0: i32, %arg1: i32, %arg2: i32) -> (i32, i32, i32) {
    %c0_i32 = arith.constant 0 : i32
    %c0_i32_0 = arith.constant 0 : i32
    return %arg0, %arg1, %c0_i32 : i32, i32, i32
  }
}

</mosaic_0001>

<llo_original>
// kernel: tpu_custom_call.1
$region0: #{tpu_custom_call.1}
  #allocation0 [shape = 'u32[]', space=smem, size = 0x4, offset = 0x4, fixed_abs, tag = 'smem constant byte address 0x4 - core index']
  #allocation1 [shape = 'u32[72,128]{1,0:T(1,128)}', space=vmem, size = 0x9000, scoped, tag = 'internal scratch']
  %s0 = inlined_call_operand.vmem [shape: s32[8,1], index: 0, kind: input, shape index: {}]
  %s1 = inlined_call_operand.vmem [shape: s32[1,16], index: 1, kind: input, shape index: {}]
  %s2 = inlined_call_operand.vmem [shape: s32[1,48], index: 2, kind: input, shape index: {}]
  %s3 = inlined_call_operand.vmem [shape: f32[8,32], index: 3, kind: input, shape index: {}]
  %s4 = inlined_call_operand.vmem [shape: f32[16,32], index: 4, kind: input, shape index: {}]
  %s5 = inlined_call_operand.vmem [shape: f32[48,32], index: 5, kind: input, shape index: {}]
  %s6 = inlined_call_operand.vmem [shape: f32[1,8,1], index: 6, kind: output, shape index: {0}]
  %s7 = inlined_call_operand.vmem [shape: f32[1,8,1], index: 7, kind: output, shape index: {1}]
  %s8 = inlined_call_operand.vmem [shape: f32[1,8,1], index: 8, kind: output, shape index: {2}]
  %9 = xla_tuple %s6, %s7, %s8
  %s10 = sld [smem:[#allocation0]]
  $region66: #{tpu_custom_call.1} parent=0
    _
  %s12 = ssub.s32 1, %s10
  %s13 = scalar_select 0, %s12, %s10
  // Predicated region
  $region2: #{tpu_custom_call.1} parent=0 // pred_check
    _
  $region3: #{tpu_custom_call.1} parent=0 // pred_check_branch
    %15 = sbr.rel (0) target = $region5
  $region4: #{tpu_custom_call.1} parent=0 // pred_region
    _
  $region5: #{tpu_custom_call.1} parent=0 // pred_fallthru
    _
  // Predicated region
  $region6: #{tpu_custom_call.1} parent=0 // pred_check
    _
  $region7: #{tpu_custom_call.1} parent=0 // pred_check_branch
    %17 = sbr.rel (0) target = $region9
  $region8: #{tpu_custom_call.1} parent=0 // pred_region
    _
  $region9: #{tpu_custom_call.1} parent=0 // pred_fallthru
    _
  // Predicated region
  $region10: #{tpu_custom_call.1} parent=0 // pred_check
    _
  $region11: #{tpu_custom_call.1} parent=0 // pred_check_branch
    %19 = sbr.rel (0) target = $region13
  $region12: #{tpu_custom_call.1} parent=0 // pred_region
    %s20 = sadd.s32 0, 0
    %p21 = scmp.lt.s32.totalorder %s20, 0
    %s22 = scalar_select %p21, %s20, 0
    %p23 = scmp.lt.s32.totalorder %s22, 0
    %s24 = scalar_select %p23, %s22, 0
    %s25 = scalar_lea.vmem %s2, %s24
    %s26 = sadd.s32 0, 0
    %p27 = scmp.lt.s32.totalorder %s26, 0
    %s28 = scalar_select %p27, %s26, 0
  $region13: #{tpu_custom_call.1} parent=0 // pred_fallthru
    _
  // Predicated region
  $region14: #{tpu_custom_call.1} parent=0 // pred_check
    _
  $region15: #{tpu_custom_call.1} parent=0 // pred_check_branch
    %30 = sbr.rel (0) target = $region17
  $region16: #{tpu_custom_call.1} parent=0 // pred_region
    _
  $region17: #{tpu_custom_call.1} parent=0 // pred_fallthru
    _
  // Predicated region
  $region18: #{tpu_custom_call.1} parent=0 // pred_check
    _
  $region19: #{tpu_custom_call.1} parent=0 // pred_check_branch
    %32 = sbr.rel (0) target = $region21
  $region20: #{tpu_custom_call.1} parent=0 // pred_region
    _
  $region21: #{tpu_custom_call.1} parent=0 // pred_fallthru
    _
  // Predicated region
  $region22: #{tpu_custom_call.1} parent=0 // pred_check
    _
  $region23: #{tpu_custom_call.1} parent=0 // pred_check_branch
    %34 = sbr.rel (0) target = $region25
  $region24: #{tpu_custom_call.1} parent=0 // pred_region
    %s35 = sadd.s32 0, 0
    %p36 = scmp.lt.s32.totalorder %s35, 0
    %s37 = scalar_select %p36, %s35, 0
    %s38 = smul.u32 16, %s37
    %s39 = ssub.s32 6, %s38
    %s40 = smul.u32 8, %s39
    %p41 = scmp.lt.s32.totalorder %s38, 5
    %s42 = scalar_select %p41, %s38, 5
    %s43 = smul.addr %s42, 8
    %s44 = scalar_lea.vmem %s5, %s43
    %s45 = sadd.s32 0, 0
    %p46 = scmp.lt.s32.totalorder %s45, 0
    %s47 = scalar_select %p46, %s45, 0
    %s48 = smul.u32 16, %s47
    %s49 = ssub.s32 6, %s48
    %s50 = smul.u32 8, %s49
  $region25: #{tpu_custom_call.1} parent=0 // pred_fallthru
    _
  %s51 = sadd.s32 0, 0
  %p52 = scmp.lt.s32.totalorder %s51, 0
  %s53 = scalar_select %p52, %s51, 0
  %p54 = scmp.lt.s32.totalorder %s53, 0
  %s55 = scalar_select %p54, %s53, 0
  %s56 = scalar_lea.vmem %s2, %s55
  %s57 = sadd.s32 0, 0
  %p58 = scmp.lt.s32.totalorder %s57, 0
  %s59 = scalar_select %p58, %s57, 0
  %s60 = smul.u32 16, %s59
  %s61 = ssub.s32 6, %s60
  %s62 = smul.u32 8, %s61
  %p63 = scmp.lt.s32.totalorder %s60, 5
  %s64 = scalar_select %p63, %s60, 5
  %s65 = smul.addr %s64, 8
  %s66 = scalar_lea.vmem %s5, %s65
  %s67 = sadd.s32 0, 0
  %p68 = scmp.lt.s32.totalorder %s67, 0
  %s69 = scalar_select %p68, %s67, 0
  %p70 = scmp.lt.s32.totalorder %s69, 0
  %s71 = scalar_select %p70, %s69, 0
  %s72 = scalar_lea.vmem %s2, %s71
  %s73 = sadd.s32 0, 0
  %p74 = scmp.lt.s32.totalorder %s73, 0
  %s75 = scalar_select %p74, %s73, 0
  %s76 = sadd.s32 0, 0
  %p77 = scmp.lt.s32.totalorder %s76, 0
  %s78 = scalar_select %p77, %s76, 0
  %s79 = smul.u32 16, %s78
  %s80 = ssub.s32 6, %s79
  %s81 = smul.u32 8, %s80
  %p82 = scmp.lt.s32.totalorder %s79, 5
  %s83 = scalar_select %p82, %s79, 5
  %s84 = smul.addr %s83, 8
  %s85 = scalar_lea.vmem %s5, %s84
  %s86 = sadd.s32 0, 0
  %p87 = scmp.lt.s32.totalorder %s86, 0
  %s88 = scalar_select %p87, %s86, 0
  %s89 = smul.u32 16, %s88
  %s90 = ssub.s32 6, %s89
  %s91 = smul.u32 8, %s90
  %v92 = vld [vmem:[%s3] sm:$0xff]
  %v93 = vmul.f32 %v92, 14.285714
  %p94 = scmp.eq.s32.totalorder 0, 0
  // Predicated region
  $region26: #{tpu_custom_call.1} parent=0 // pred_check
    %p95 = pneg %p94
  $region27: #{tpu_custom_call.1} parent=0 // pred_check_branch
    %97 = sbr.rel (%p95) target = $region29
  $region28: #{tpu_custom_call.1} parent=0 // pred_region
    %vm98 = vcmask 7168
    %99 = vst.msk [vmem:[%s6] sm:$0xff] %vm98, -inf
    %100 = vst.msk [vmem:[%s7] sm:$0xff] %vm98, 0.0
    %101 = vst.msk [vmem:[%s8] sm:$0xff] %vm98, 0.0
  $region29: #{tpu_custom_call.1} parent=0 // pred_fallthru
    _
  %p102 = scmp.eq.s32.totalorder 0, 0
  %p103 = pnand %p94, %p102
  %p104 = pneg %p103
  // Predicated region
  $region30: #{tpu_custom_call.1} parent=0 // pred_check
    _
  $region31: #{tpu_custom_call.1} parent=0 // pred_check_branch
    %106 = sbr.rel (%p103) target = $region33
  $region32: #{tpu_custom_call.1} parent=0 // pred_region
    %v107 = vld [vmem:[%s4] sm:$0xff]
    %v108 = vld [vmem:[%s4 + $0x8] sm:$0xff]
    %vm109 = vcmask 261120
    %v111 = vsel %vm109, %v93, 0
    %v114 = vsel %vm109, %v107, 0
    %v117 = vsel %vm109, %v108, 0
    %119 = vmatpush.xpose.msra.mxu0 0.0
    %120 = vmatpush.xpose.msra.mxu0 0.0
    %121 = vmatpush.xpose.msra.mxu0 0.0
    %122 = vmatpush.xpose.msra.mxu0 0.0
    %123 = vmatpush.xpose.msra.mxu0 0.0
    %124 = vmatpush.xpose.msra.mxu0 0.0
    %125 = vmatpush.xpose.msra.mxu0 0.0
    %126 = vmatpush.xpose.msra.mxu0 0.0
    %127 = vmatpush.xpose.msra.mxu0 0.0
    %128 = vmatpush.xpose.msra.mxu0 0.0
    %129 = vmatpush.xpose.msra.mxu0 0.0
    %130 = vmatpush.xpose.msra.mxu0 0.0
    %131 = vmatpush.xpose.msra.mxu0 0.0
    %132 = vmatpush.xpose.msra.mxu0 0.0
    %133 = vmatpush.xpose.msra.mxu0 %v117
    %134 = vmatpush.xpose.msra.mxu0 %v114
    %135 = vmatmul.f32.gmra.mxu0 %v111
    %v136 = vpop.f32.mrf.mxu0
    %v137 = vadd.f32 0.0, %v136
    %138 = vdwg.mxu0
    %s139 = smul.u32 0, 8
    %v140 = vlaneseq
    %v141 = vshrl.u32 %v140, 7
    %v142 = vstv %s139
    %v143 = vadd.s32 %v142, %v141
    %v144 = vlaneseq
    %v145 = vand.u32 %v144, 127
    %vm146 = vcmp.ne.s32.totalorder %v143, %v145
    %vm147 = vcmask 130048
    %v148 = vsel %vm147, %v137, -inf
    %149 = vmax.xlane.f32.xlu0 %v148
    %v150 = vpop.xlane.xlu0 %149
    %v151 = vsub.f32 %v137, %v150
    %v152 = vmul.f32 %v151, 1.442695
    %v153 = vpow.pop %v152
    %v154 = vsel %vm146, %v153, 0.0
    %v155 = vld [vmem:[%s0] sm:$0xff]
    %v156 = vld [vmem:[%s1] sm:$0x1]
    %157 = vset.pattern.permute.xlu0 0
    %158 = vperm.xlu0 %157, %v155
    %v159 = vpop.permute.xlu0 %158
    %v160 = vperm.slane %v156, 0
    %vm161 = vcmp.eq.s32.totalorder %v159, %v160
    %vm162 = vmand %vm161, %vm146
    %vm163 = vcmask 7168
    %164 = vst.msk [vmem:[%s6] sm:$0xff] %vm163, %v150
    %v165 = vsel %vm147, %v154, 0.0
    %166 = vadd.xlane.f32.xlu0 %v165
    %v167 = vpop.xlane.xlu0 %166
    %168 = vst.msk [vmem:[%s7] sm:$0xff] %vm163, %v167
    %v169 = vsel %vm162, %v137, 0.0
    %v170 = vsel %vm147, %v169, 0.0
    %171 = vadd.xlane.f32.xlu0 %v170
    %v172 = vpop.xlane.xlu0 %171
    %173 = vst.msk [vmem:[%s8] sm:$0xff] %vm163, %v172
  $region33: #{tpu_custom_call.1} parent=0 // pred_fallthru
    _
  %s174 = sadd.s32 0, 0
  %s175 = smul.u32 %s174, 128
  %v176 = vld [vmem:[%s85] sm:$0xff]
  %v177 = vld [vmem:[%s85 + $0x8] sm:$0xff]
  %v178 = vld [vmem:[%s85 + $0x10] sm:$0xff]
  %v179 = vld [vmem:[%s85 + $0x18] sm:$0xff]
  %v180 = vld [vmem:[%s85 + $0x20] sm:$0xff]
  %v181 = vld [vmem:[%s85 + $0x28] sm:$0xff]
  %v182 = vld [vmem:[%s85 + $0x30] sm:$0xff]
  %v183 = vld [vmem:[%s85 + $0x38] sm:$0xff]
  %v184 = vld [vmem:[%s85 + $0x40] sm:$0xff]
  %v185 = vld [vmem:[%s85 + $0x48] sm:$0xff]
  %v186 = vld [vmem:[%s85 + $0x50] sm:$0xff]
  %v187 = vld [vmem:[%s85 + $0x58] sm:$0xff]
  %v188 = vld [vmem:[%s85 + $0x60] sm:$0xff]
  %v189 = vld [vmem:[%s85 + $0x68] sm:$0xff]
  %v190 = vld [vmem:[%s85 + $0x70] sm:$0xff]
  %v191 = vld [vmem:[%s85 + $0x78] sm:$0xff]
  %vm192 = vcmask 261120
  %v194 = vsel %vm192, %v93, 0
  %v197 = vsel %vm192, %v176, 0
  %v200 = vsel %vm192, %v177, 0
  %v203 = vsel %vm192, %v178, 0
  %v206 = vsel %vm192, %v179, 0
  %v209 = vsel %vm192, %v180, 0
  %v212 = vsel %vm192, %v181, 0
  %v215 = vsel %vm192, %v182, 0
  %v218 = vsel %vm192, %v183, 0
  %v221 = vsel %vm192, %v184, 0
  %v224 = vsel %vm192, %v185, 0
  %v227 = vsel %vm192, %v186, 0
  %v230 = vsel %vm192, %v187, 0
  %v233 = vsel %vm192, %v188, 0
  %v236 = vsel %vm192, %v189, 0
  %v239 = vsel %vm192, %v190, 0
  %v242 = vsel %vm192, %v191, 0
  %244 = vmatpush.xpose.msra.mxu0 %v242
  %245 = vmatpush.xpose.msra.mxu0 %v239
  %246 = vmatpush.xpose.msra.mxu0 %v236
  %247 = vmatpush.xpose.msra.mxu0 %v233
  %248 = vmatpush.xpose.msra.mxu0 %v230
  %249 = vmatpush.xpose.msra.mxu0 %v227
  %250 = vmatpush.xpose.msra.mxu0 %v224
  %251 = vmatpush.xpose.msra.mxu0 %v221
  %252 = vmatpush.xpose.msra.mxu0 %v218
  %253 = vmatpush.xpose.msra.mxu0 %v215
  %254 = vmatpush.xpose.msra.mxu0 %v212
  %255 = vmatpush.xpose.msra.mxu0 %v209
  %256 = vmatpush.xpose.msra.mxu0 %v206
  %257 = vmatpush.xpose.msra.mxu0 %v203
  %258 = vmatpush.xpose.msra.mxu0 %v200
  %259 = vmatpush.xpose.msra.mxu0 %v197
  %260 = vmatmul.f32.gmra.mxu0 %v194
  %v261 = vpop.f32.mrf.mxu0
  %v262 = vadd.f32 0.0, %v261
  %263 = vdwg.mxu0
  %v264 = vld [vmem:[%s0] sm:$0xff]
  %v265 = vld [vmem:[%s72] sm:$0x1]
  %266 = vset.pattern.permute.xlu0 0
  %267 = vperm.xlu0 %266, %v264
  %v268 = vpop.permute.xlu0 %267
  %v269 = vperm.slane %v265, 0
  %vm270 = vcmp.eq.s32.totalorder %v268, %v269
  %s271 = sadd.s32 %s175, 128
  %p272 = scmp.gt.s32.totalorder %s271, 48
  // Predicated region
  $region34: #{tpu_custom_call.1} parent=0 // pred_check
    %p273 = pneg %p272
  $region35: #{tpu_custom_call.1} parent=0 // pred_check_branch
    %275 = sbr.rel (%p273) target = $region37
  $region36: #{tpu_custom_call.1} parent=0 // pred_region
    %v276 = vlaneseq
    %v277 = vand.u32 %v276, 127
    %v278 = vstv %s175
    %v279 = vadd.s32 %v278, %v277
    %vm280 = vcmp.lt.s32.totalorder %v279, 48
    %v281 = vsel %vm280, %v262, -inf
    %vm282 = vmand %vm270, %vm280
    %v283 = vld [vmem:[%s6] sm:$0xff]
    %284 = vmax.xlane.f32.xlu0 %v281
    %v285 = vpop.xlane.xlu0 %284
    %v286 = vmax.f32 %v283, %v285
    %288 = vset.pattern.permute.xlu0 0
    %289 = vperm.xlu0 %288, %v286
    %v290 = vpop.permute.xlu0 %289
    %v292 = vsub.f32 %v281, %v290
    %v293 = vmul.f32 %v292, 1.442695
    %v294 = vpow.pop %v293
    %v295 = vld [vmem:[%s7] sm:$0xff]
    %v296 = vsub.f32 %v283, %v286
    %v297 = vmul.f32 %v296, 1.442695
    %v298 = vpow.pop %v297
    %v299 = vmul.f32 %v295, %v298
    %300 = vadd.xlane.f32.xlu0 %v294
    %v301 = vpop.xlane.xlu0 %300
    %v302 = vadd.f32 %v299, %v301
    %vm303 = vcmask 7168
    %304 = vst.msk [vmem:[%s7] sm:$0xff] %vm303, %v302
    %v305 = vld [vmem:[%s8] sm:$0xff]
    %v306 = vsel %vm282, %v262, 0.0
    %307 = vadd.xlane.f32.xlu0 %v306
    %v308 = vpop.xlane.xlu0 %307
    %v309 = vadd.f32 %v305, %v308
    %310 = vst.msk [vmem:[%s8] sm:$0xff] %vm303, %v309
    %311 = vst.msk [vmem:[%s6] sm:$0xff] %vm303, %v286
  $region37: #{tpu_custom_call.1} parent=0 // pred_fallthru
    _
  %p312 = scmp.le.s32.totalorder %s271, 48
  // Predicated region
  $region38: #{tpu_custom_call.1} parent=0 // pred_check
    %p313 = pneg %p312
  $region39: #{tpu_custom_call.1} parent=0 // pred_check_branch
    %315 = sbr.rel (%p313) target = $region41
  $region40: #{tpu_custom_call.1} parent=0 // pred_region
    %v316 = vld [vmem:[%s6] sm:$0xff]
    %317 = vmax.xlane.f32.xlu0 %v262
    %v318 = vpop.xlane.xlu0 %317
    %v319 = vmax.f32 %v316, %v318
    %321 = vset.pattern.permute.xlu0 0
    %322 = vperm.xlu0 %321, %v319
    %v323 = vpop.permute.xlu0 %322
    %v325 = vsub.f32 %v262, %v323
    %v326 = vmul.f32 %v325, 1.442695
    %v327 = vpow.pop %v326
    %v328 = vld [vmem:[%s7] sm:$0xff]
    %v329 = vsub.f32 %v316, %v319
    %v330 = vmul.f32 %v329, 1.442695
    %v331 = vpow.pop %v330
    %v332 = vmul.f32 %v328, %v331
    %333 = vadd.xlane.f32.xlu0 %v327
    %v334 = vpop.xlane.xlu0 %333
    %v335 = vadd.f32 %v332, %v334
    %vm336 = vcmask 7168
    %337 = vst.msk [vmem:[%s7] sm:$0xff] %vm336, %v335
    %v338 = vld [vmem:[%s8] sm:$0xff]
    %v339 = vsel %vm270, %v262, 0.0
    %340 = vadd.xlane.f32.xlu0 %v339
    %v341 = vpop.xlane.xlu0 %340
    %v342 = vadd.f32 %v338, %v341
    %343 = vst.msk [vmem:[%s8] sm:$0xff] %vm336, %v342
    %344 = vst.msk [vmem:[%s6] sm:$0xff] %vm336, %v319
  $region41: #{tpu_custom_call.1} parent=0 // pred_fallthru
    _
  // Predicated region
  $region42: #{tpu_custom_call.1} parent=0 // pred_check
    _
  $region43: #{tpu_custom_call.1} parent=0 // pred_check_branch
    %346 = sbr.rel (0) target = $region45
  $region44: #{tpu_custom_call.1} parent=0 // pred_region
    _
  $region45: #{tpu_custom_call.1} parent=0 // pred_fallthru
    _
  // Predicated region
  $region46: #{tpu_custom_call.1} parent=0 // pred_check
    _
  $region47: #{tpu_custom_call.1} parent=0 // pred_check_branch
    %348 = sbr.rel (0) target = $region49
  $region48: #{tpu_custom_call.1} parent=0 // pred_region
    _
  $region49: #{tpu_custom_call.1} parent=0 // pred_fallthru
    _
  // Predicated region
  $region50: #{tpu_custom_call.1} parent=0 // pred_check
    _
  $region51: #{tpu_custom_call.1} parent=0 // pred_check_branch
    %350 = sbr.rel (0) target = $region53
  $region52: #{tpu_custom_call.1} parent=0 // pred_region
    _
  $region53: #{tpu_custom_call.1} parent=0 // pred_fallthru
    _
  // Predicated region
  $region54: #{tpu_custom_call.1} parent=0 // pred_check
    _
  $region55: #{tpu_custom_call.1} parent=0 // pred_check_branch
    %352 = sbr.rel (0) target = $region57
  $region56: #{tpu_custom_call.1} parent=0 // pred_region
    _
  $region57: #{tpu_custom_call.1} parent=0 // pred_fallthru
    _
  // Predicated region
  $region58: #{tpu_custom_call.1} parent=0 // pred_check
    _
  $region59: #{tpu_custom_call.1} parent=0 // pred_check_branch
    %354 = sbr.rel (0) target = $region61
  $region60: #{tpu_custom_call.1} parent=0 // pred_region
    _
  $region61: #{tpu_custom_call.1} parent=0 // pred_fallthru
    _
  // Predicated region
  $region62: #{tpu_custom_call.1} parent=0 // pred_check
    _
  $region63: #{tpu_custom_call.1} parent=0 // pred_check_branch
    %356 = sbr.rel (0) target = $region65
  $region64: #{tpu_custom_call.1} parent=0 // pred_region
    _
  $region65: #{tpu_custom_call.1} parent=0 // pred_fallthru
    _

</llo_original>
